<compile_context>
chip_gen: v5e
topology: v5e:2x2
jax: 0.10.0
libtpu: 0.0.40
codegen_flags: <defaults>
</compile_context>

<pallas_src>
import functools

import jax
import jax.numpy as jnp
from jax.experimental import pallas as pl
from jax.experimental.pallas import tpu as pltpu


def _round_up(a, b):
    return (a + b - 1) // b * b


# --------------- single-pass kernel (full spatial extent in one block) -------

def _center_kernel(x_ref, b_ref, o_ref, *, inv_hw):
    # x_ref: (TM, HW)  rows = flattened (n, c) pairs, lanes = flattened spatial
    # b_ref: (TM, 1)   per-row (i.e. per-channel) bias, float32
    x = x_ref[...]
    row_sum = jnp.sum(x.astype(jnp.float32), axis=-1, keepdims=True)   # f32 accum
    shift = b_ref[...] - row_sum * inv_hw                              # bias - mean
    o_ref[...] = (x + shift.astype(x.dtype)).astype(o_ref.dtype)


# --------------- two-pass fallback (huge H*W: tile the spatial axis) ---------

def _row_mean_kernel(x_ref, mean_ref, *, hw, thw, inv_hw):
    k = pl.program_id(1)

    @pl.when(k == 0)
    def _init():
        mean_ref[...] = jnp.zeros_like(mean_ref)

    x = x_ref[...]
    if hw % thw != 0:
        # Mask padded lanes of the (possibly partial) last spatial chunk.
        col = k * thw + jax.lax.broadcasted_iota(jnp.int32, x.shape, 1)
        x = jnp.where(col < hw, x, jnp.zeros_like(x))
    mean_ref[...] += jnp.sum(x.astype(jnp.float32), axis=-1, keepdims=True)

    @pl.when(k == pl.num_programs(1) - 1)
    def _finalize():
        mean_ref[...] = mean_ref[...] * inv_hw


def _apply_shift_kernel(x_ref, s_ref, o_ref):
    x = x_ref[...]
    o_ref[...] = (x + s_ref[...].astype(x.dtype)).astype(o_ref.dtype)


# ------------------------------- wrapper --------------------------------------

def layer_centering_2d(x, bias, *, target_block_bytes=4 * 1024 * 1024,
                       donate_input=False):
    """x: (N, C, H, W); bias: (1, C, 1, 1) -> (N, C, H, W), same dtype as x.

    donate_input=True adds input_output_aliases={0: 0}; only useful if the caller
    actually donates x at the jit boundary (otherwise XLA inserts a copy).
    """
    N, C, H, W = x.shape
    HW, NC = H * W, N * C
    itemsize = jnp.dtype(x.dtype).itemsize
    sublane = max(8, 32 // itemsize)          # 8 (f32) / 16 (bf16) / 32 (i8)
    lane_hw = _round_up(HW, 128)              # VMEM lane padding of spatial dim
    nc_pad = _round_up(NC, sublane)

    # Flattened views: rows ordered (n, c) with c fastest, spatial on lanes.
    x2 = x.reshape(NC, HW)
    # Per-row bias column, kept in float32 end-to-end (no bf16 round-trip).
    row_bias = jnp.broadcast_to(
        bias.reshape(1, C).astype(jnp.float32), (N, C)).reshape(NC, 1)

    aliases = {0: 0} if donate_input else {}

    if sublane * lane_hw * itemsize <= target_block_bytes:
        # ---- single-pass: whole spatial extent in one lane-dense block ------
        tm = max(sublane,
                 (target_block_bytes // (lane_hw * itemsize)) // sublane * sublane)
        tm = min(tm, nc_pad, 4096)            # 4096 caps the lane-padded bias cost
        if nc_pad > sublane:
            # v7x megacore: keep >= 2 grid steps so both TensorCores get work.
            tm = min(tm, _round_up(pl.cdiv(NC, 2), sublane))
        grid = (pl.cdiv(NC, tm),)

        x_blk = tm * lane_hw * itemsize
        b_blk = tm * 128 * 4                  # (tm, 1) f32 block, lane-padded
        vmem_limit = 2 * (2 * x_blk + b_blk) + tm * lane_hw * 4 + (2 << 20)
        vmem_limit = int(min(max(vmem_limit, 16 << 20), 48 << 20))

        out2 = pl.pallas_call(
            functools.partial(_center_kernel, inv_hw=float(1.0 / HW)),
            out_shape=jax.ShapeDtypeStruct((NC, HW), x.dtype),
            grid=grid,
            in_specs=[
                pl.BlockSpec((tm, HW), lambda i: (i, 0)),   # x rows (lane-dense)
                pl.BlockSpec((tm, 1), lambda i: (i, 0)),    # per-row f32 bias
            ],
            out_specs=pl.BlockSpec((tm, HW), lambda i: (i, 0)),
            compiler_params=pltpu.CompilerParams(
                dimension_semantics=("parallel",),
                vmem_limit_bytes=vmem_limit),
            input_output_aliases=aliases,
        )(x2, row_bias)
    else:
        # ---- two-pass fallback: tile the spatial axis as well ----------------
        thw = max(128, (target_block_bytes // (sublane * itemsize)) // 128 * 128)
        thw = min(thw, lane_hw)
        tm = sublane
        grid = (pl.cdiv(NC, tm), pl.cdiv(HW, thw))

        x_blk = tm * thw * itemsize
        vmem_limit = 2 * (2 * x_blk + tm * 128 * 4) + tm * thw * 4 + (2 << 20)
        vmem_limit = int(min(max(vmem_limit, 16 << 20), 48 << 20))

        # Pass 1: per-row mean, accumulated in an f32 resident output block.
        means = pl.pallas_call(
            functools.partial(_row_mean_kernel, hw=HW, thw=thw,
                              inv_hw=float(1.0 / HW)),
            out_shape=jax.ShapeDtypeStruct((NC, 1), jnp.float32),
            grid=grid,
            in_specs=[pl.BlockSpec((tm, thw), lambda i, k: (i, k))],
            out_specs=pl.BlockSpec((tm, 1), lambda i, k: (i, 0)),
            compiler_params=pltpu.CompilerParams(
                dimension_semantics=("parallel", "arbitrary"),
                vmem_limit_bytes=vmem_limit),
        )(x2)

        shift = row_bias - means              # (NC, 1) float32, tiny XLA op

        # Pass 2: y = x + (bias - mean), fully parallel grid.
        out2 = pl.pallas_call(
            _apply_shift_kernel,
            out_shape=jax.ShapeDtypeStruct((NC, HW), x.dtype),
            grid=grid,
            in_specs=[
                pl.BlockSpec((tm, thw), lambda i, k: (i, k)),
                pl.BlockSpec((tm, 1), lambda i, k: (i, 0)),
            ],
            out_specs=pl.BlockSpec((tm, thw), lambda i, k: (i, k)),
            compiler_params=pltpu.CompilerParams(
                dimension_semantics=("parallel", "parallel"),
                vmem_limit_bytes=vmem_limit),
            input_output_aliases=aliases,
        )(x2, shift)

    return out2.reshape(N, C, H, W)


if __name__ == "__main__":
    key = jax.random.PRNGKey(0)
    N, C, H, W = 2, 4, 16, 16

    x = jax.random.normal(key, (N, C, H, W), dtype=jnp.float32)
    bias_zero = jnp.zeros((1, C, 1, 1), dtype=jnp.float32)
    bias_rand = jax.random.normal(jax.random.PRNGKey(1), (1, C, 1, 1),
                                  dtype=jnp.float32)
    # Non-128-multiple spatial extent (masked lanes).
    x_odd = jax.random.normal(jax.random.PRNGKey(2), (2, 4, 10, 10),
                              dtype=jnp.float32)

    def ref(xx, bb):
        return xx - jnp.mean(xx, axis=(-2, -1), keepdims=True) + bb

    for bias in (bias_zero, bias_rand):
        # Single-pass path (default ~4 MiB block budget).
        out = jax.block_until_ready(layer_centering_2d(x, bias))
        assert out.shape == x.shape and out.dtype == x.dtype
        assert jnp.allclose(out, ref(x, bias), atol=1e-5, rtol=1e-5)

        # Two-pass fallback (forced via tiny block budget) exercising the
        # HW-chunked f32 accumulator used for very large spatial extents.
        out2 = jax.block_until_ready(
            layer_centering_2d(x, bias, target_block_bytes=4096))
        assert jnp.allclose(out2, ref(x, bias), atol=1e-5, rtol=1e-5)

    out3 = jax.block_until_ready(layer_centering_2d(x_odd, bias_rand))
    assert jnp.allclose(out3, ref(x_odd, bias_rand), atol=1e-5, rtol=1e-5)
    out4 = jax.block_until_ready(
        layer_centering_2d(x_odd, bias_rand, target_block_bytes=2048))
    assert jnp.allclose(out4, ref(x_odd, bias_rand), atol=1e-5, rtol=1e-5)

    print("KERNEL_OK")
</pallas_src>

<mosaic_0001>
module attributes {stable_mosaic.version = 11 : i64} {
  func.func @_center_kernel(%arg0: i32, %arg1: memref<8x256xf32, #tpu.memory_space<vmem>>, %arg2: memref<8x1xf32, #tpu.memory_space<vmem>>, %arg3: memref<8x256xf32, #tpu.memory_space<vmem>>) attributes {dimension_semantics = [#tpu.dimension_semantics<parallel>], iteration_bounds = array<i64: 1>, scalar_prefetch = 0 : i64, scratch_operands = 0 : i64, tpu.core_type = #tpu.core_type<tc>, window_params = [{transform_indices = @transform_0, window_bounds = array<i64: 8, 256>}, {transform_indices = @transform_1, window_bounds = array<i64: 8, 1>}, {transform_indices = @transform_2, window_bounds = array<i64: 8, 256>}]} {
    %c0 = arith.constant 0 : index
    %c0_0 = arith.constant 0 : index
    %0 = vector.load %arg1[%c0, %c0_0] : memref<8x256xf32, #tpu.memory_space<vmem>>, vector<8x256xf32>
    %cst = arith.constant dense<0.000000e+00> : vector<8xf32>
    %1 = vector.multi_reduction <add>, %0, %cst [1] : vector<8x256xf32> to vector<8xf32>
    %2 = vector.shape_cast %1 : vector<8xf32> to vector<8x1xf32>
    %c0_1 = arith.constant 0 : index
    %c0_2 = arith.constant 0 : index
    %3 = vector.load %arg2[%c0_1, %c0_2] : memref<8x1xf32, #tpu.memory_space<vmem>>, vector<8x1xf32>
    %cst_3 = arith.constant 3.906250e-03 : f32
    %4 = vector.broadcast %cst_3 : f32 to vector<8x1xf32>
    %5 = arith.mulf %2, %4 : vector<8x1xf32>
    %6 = arith.subf %3, %5 : vector<8x1xf32>
    %7 = vector.broadcast %6 : vector<8x1xf32> to vector<8x256xf32>
    %8 = arith.addf %0, %7 : vector<8x256xf32>
    %c0_4 = arith.constant 0 : index
    %c0_5 = arith.constant 0 : index
    %9 = vector.load %arg3[%c0_4, %c0_5] : memref<8x256xf32, #tpu.memory_space<vmem>>, vector<8x256xf32>
    tpu.vector_store %arg3[%c0_4, %c0_5], %8 {strides = array<i32>} : memref<8x256xf32, #tpu.memory_space<vmem>>, vector<8x256xf32>,
    return
  }
  func.func @transform_0(%arg0: i32) -> (i32, i32) {
    %c0_i32 = arith.constant 0 : i32
    %c0_i32_0 = arith.constant 0 : i32
    return %arg0, %c0_i32 : i32, i32
  }
  func.func @transform_1(%arg0: i32) -> (i32, i32) {
    %c0_i32 = arith.constant 0 : i32
    %c0_i32_0 = arith.constant 0 : i32
    return %arg0, %c0_i32 : i32, i32
  }
  func.func @transform_2(%arg0: i32) -> (i32, i32) {
    %c0_i32 = arith.constant 0 : i32
    %c0_i32_0 = arith.constant 0 : i32
    return %arg0, %c0_i32 : i32, i32
  }
}

</mosaic_0001>

<llo_original>
// kernel: tpu_custom_call.1
$region0: #{tpu_custom_call.1}
  #allocation0 [shape = 'u32[]', space=smem, size = 0x4, offset = 0x4, fixed_abs, tag = 'smem constant byte address 0x4 - core index']
  #allocation1 [shape = 'u32[72,128]{1,0:T(1,128)}', space=vmem, size = 0x9000, scoped, tag = 'internal scratch']
  %s0 = inlined_call_operand.hbm [shape: f32[8,256], index: 0, kind: input, shape index: {}]
  %s1 = inlined_call_operand.vmem [shape: f32[8,1], index: 1, kind: input, shape index: {}]
  %s2 = inlined_call_operand.hbm [shape: f32[8,256], index: 2, kind: output, shape index: {}]
  %s3 = sld [smem:[#allocation0]]
  $region22: #{tpu_custom_call.1} parent=0
    _
  %s5 = ssub.s32 1, %s3
  %s6 = scalar_select 0, %s5, %s3
  $region1: #{tpu_custom_call.1} parent=0
    #allocation2 [shape = 'u8[8192]{0}', space=vmem, size = 0x2000, scoped, tag = 'input window, operand 0, single buffered']
    #allocation3 [shape = 's32[1]{0}', space=sflag, size = 0x4, scoped, tag = 'scoped memory for tpu_custom_call.1']
    #allocation4 [shape = 's32[1]{0}', space=sflag, size = 0x4, scoped, tag = 'scoped memory for tpu_custom_call.1']
    #allocation5 [shape = 'u8[8192]{0}', space=vmem, size = 0x2000, scoped, tag = 'output window, operand 0, single buffered']
    %7 = vsyncpa [#allocation3], 0
    %8 = vsyncpa [#allocation4], 0
    // Predicated region
    $region2: #{tpu_custom_call.1} parent=1 // pred_check
      _
    $region3: #{tpu_custom_call.1} parent=1 // pred_check_branch
      %10 = sbr.rel (0) target = $region5
    $region4: #{tpu_custom_call.1} parent=1 // pred_region
      %12 = vsyncadd [#allocation3], 0
      %s14 = sshll.u32 %s0, 4
      %s15 = int_to_ptr.hbm [resolvable:$true] %s14
      %s16 = sshll.u32 [#allocation2], 4
      %s17 = int_to_ptr.vmem [resolvable:$true] %s16
      %19 = dma.hbm_to_vmem [thread:$0]  %s15, 256, %s17, [#allocation3]
    $region5: #{tpu_custom_call.1} parent=1 // pred_fallthru
      _
    // Predicated region
    $region6: #{tpu_custom_call.1} parent=1 // pred_check
      _
    $region7: #{tpu_custom_call.1} parent=1 // pred_check_branch
      %21 = sbr.rel (0) target = $region9
    $region8: #{tpu_custom_call.1} parent=1 // pred_region
      _
    $region9: #{tpu_custom_call.1} parent=1 // pred_fallthru
      _
    // Predicated region
    $region10: #{tpu_custom_call.1} parent=1 // pred_check
      _
    $region11: #{tpu_custom_call.1} parent=1 // pred_check_branch
      %23 = sbr.rel (0) target = $region13
    $region12: #{tpu_custom_call.1} parent=1 // pred_region
      %25 = dma.done [#allocation3], 256
    $region13: #{tpu_custom_call.1} parent=1 // pred_fallthru
      _
    %v26 = vld [vmem:[#allocation2] sm:$0xff]
    %v27 = vld [vmem:[#allocation2 + $0x8] sm:$0xff]
    %v28 = vadd.f32 %v26, %v27
    %29 = vadd.xlane.f32.xlu0 %v28
    %v30 = vpop.xlane.xlu0 %29
    %v31 = vld [vmem:[%s1] sm:$0xff]
    %v32 = vmul.f32 %v30, 0.00390625
    %v33 = vsub.f32 %v31, %v32
    %35 = vset.pattern.permute.xlu0 0
    %36 = vperm.xlu0 %35, %v33
    %v37 = vpop.permute.xlu0 %36
    %v39 = vadd.f32 %v26, %v37
    %v40 = vadd.f32 %v27, %v37
    %41 = vst [vmem:[#allocation5] sm:$0xff] %v39
    %42 = vst [vmem:[#allocation5 + $0x8] sm:$0xff] %v40
    // Predicated region
    $region14: #{tpu_custom_call.1} parent=1 // pred_check
      _
    $region15: #{tpu_custom_call.1} parent=1 // pred_check_branch
      %44 = sbr.rel (0) target = $region17
    $region16: #{tpu_custom_call.1} parent=1 // pred_region
      %46 = vsyncadd [#allocation4], 0
      %s48 = sshll.u32 [#allocation5], 4
      %s49 = int_to_ptr.vmem [resolvable:$true] %s48
      %s50 = sshll.u32 %s2, 4
      %s51 = int_to_ptr.hbm [resolvable:$true] %s50
      %53 = dma.vmem_to_hbm [thread:$0]  %s49, 256, %s51, [#allocation4]
    $region17: #{tpu_custom_call.1} parent=1 // pred_fallthru
      _
    // Predicated region
    $region18: #{tpu_custom_call.1} parent=1 // pred_check
      _
    $region19: #{tpu_custom_call.1} parent=1 // pred_check_branch
      %55 = sbr.rel (0) target = $region21
    $region20: #{tpu_custom_call.1} parent=1 // pred_region
      %57 = dma.done [#allocation4], 256
    $region21: #{tpu_custom_call.1} parent=1 // pred_fallthru
      _
    %58 = vsyncpa [#allocation3], 1
    %59 = vsyncpa [#allocation4], 1

</llo_original>
